<compile_context>
chip_gen: v7x
topology: tpu7x:2x2x1
jax: 0.10.0
libtpu: 0.0.40
codegen_flags: <defaults>
</compile_context>

<pallas_src>
from typing import NamedTuple

import numpy as np
import jax
import jax.numpy as jnp
from jax.experimental import pallas as pl
from jax.experimental.pallas import tpu as pltpu


# ----------------------------------------------------------------------------
# Host-side construction of the Laplacian buffer (mirrors the torch __init__).
# ----------------------------------------------------------------------------
def _build_laplacian(nv: int, faces: np.ndarray) -> np.ndarray:
    laplacian = np.zeros([nv, nv], dtype=np.float32)
    laplacian[faces[:, 0], faces[:, 1]] = -1
    laplacian[faces[:, 1], faces[:, 0]] = -1
    laplacian[faces[:, 1], faces[:, 2]] = -1
    laplacian[faces[:, 2], faces[:, 1]] = -1
    laplacian[faces[:, 2], faces[:, 0]] = -1
    laplacian[faces[:, 0], faces[:, 2]] = -1
    r, c = np.diag_indices(nv)
    laplacian[r, c] = -laplacian.sum(1)
    for i in range(nv):
        if laplacian[i, i] != 0:
            laplacian[i, :] /= laplacian[i, i]
    return laplacian


# ----------------------------------------------------------------------------
# Tile / VMEM planning (generation aware).
# ----------------------------------------------------------------------------
def _round_up(x: int, m: int) -> int:
    return ((x + m - 1) // m) * m


def _vmem_budget_bytes() -> int:
    """Usable scoped-VMEM budget with headroom (96 MiB v5e/v6e, 48 MiB v7x)."""
    try:
        cap = getattr(pltpu.get_tpu_info(), "vmem_capacity_bytes", None)
        if cap:
            return int(cap) * 3 // 4
    except Exception:
        pass
    return 48 * 1024 * 1024            # fallback: safe on v7x's 64 MiB VMEM


def _pick_tile(n: int, want: int) -> int:
    """Largest multiple-of-128 tile <= want with modest zero-padding waste."""
    n_pad = _round_up(n, 128)
    want = max(128, int(want))
    if want >= n_pad:
        return n_pad                   # single tile, minimal padding
    t = (want // 128) * 128
    waste_cap = max(n // 16, 128)      # keep padded HBM traffic <= ~6%
    while t > 128 and (_round_up(n, t) - n) > waste_cap:
        t -= 128
    return max(t, 128)


def _vmem_usage(tm: int, tk: int, itemsize: int) -> int:
    lt = 2 * tk * tm * itemsize        # double-buffered L^T blocks (the stream)
    xt = 2 * 8 * tk * itemsize         # (3, tk) x^T blocks (3 pads to 8 sublanes)
    acc = 8 * tm * 4                   # f32 accumulator scratch
    out = 2 * 8 * 128 * 4              # lane-dense partial-sum output blocks
    return lt + xt + acc + out


def _choose_tiles(nv: int, itemsize: int, tm=None, tk=None):
    budget = _vmem_budget_bytes()
    user_tm = tm is not None
    tk = _pick_tile(nv, 2048 if tk is None else tk)
    tm = _pick_tile(nv, 1024 if tm is None else tm)
    # v7x megacore: with only 2 TensorCores a single row tile serializes the
    # whole kernel on one core; split the (parallel) row axis when possible.
    if (not user_tm and _round_up(nv, tm) // tm < 2
            and _round_up(nv, 128) >= 256):
        tm = _pick_tile(nv, _round_up(nv, 128) // 2)
    # Shrink until the double-buffered working set fits the scoped VMEM budget.
    while _vmem_usage(tm, tk, itemsize) > budget and (tm > 128 or tk > 128):
        if tk >= tm and tk > 128:
            tk = _pick_tile(nv, tk // 2)
        elif tm > 128:
            tm = _pick_tile(nv, tm // 2)
        else:
            break
    return tm, tk, _round_up(nv, tm), _round_up(nv, tk), budget


# ----------------------------------------------------------------------------
# Kernel.
# ----------------------------------------------------------------------------
def _laplacian_loss_kernel(xt_ref, lt_ref, out_ref, acc_ref):
    """grid = (row tiles i, K tiles k).

    K MUST stay the innermost ("arbitrary") axis and the output index_map must
    depend only on i: acc_ref accumulates the (3, tm) tile of y^T = x^T @ L^T
    across K and is finalized when k hits the last K tile.
    """
    k = pl.program_id(1)

    @pl.when(k == 0)
    def _():
        acc_ref[...] = jnp.zeros_like(acc_ref)

    # (3, tk) @ (tk, tm): the 3-wide axis sits on sublanes, tm on lanes.
    # Operands arrive already in L's storage dtype (bf16 default); accumulate
    # in f32 on the MXU.
    acc_ref[...] += jnp.dot(xt_ref[...], lt_ref[...],
                            preferred_element_type=jnp.float32)

    @pl.when(k == pl.num_programs(1) - 1)
    def _():
        y = acc_ref[...]
        s = jnp.sum(y * y)
        # Lane-dense (8, 128) store of the per-row-tile partial sum; the final
        # cross-tile reduction happens in XLA so the row axis stays "parallel"
        # (lets v7x shard the grid across both TensorCores).
        out_ref[...] = jnp.broadcast_to(s, out_ref.shape).astype(jnp.float32)


# ----------------------------------------------------------------------------
# Setup (register_buffer analog) + per-call wrapper.
# ----------------------------------------------------------------------------
class PreparedLaplacian(NamedTuple):
    lt: jax.Array        # (k_pad, m_pad) = L^T, zero-padded, storage dtype
    nv: int
    tm: int
    tk: int
    vmem_limit: int


def prepare_laplacian(laplacian, *, dtype=jnp.bfloat16, tm=None, tk=None
                      ) -> PreparedLaplacian:
    """One-time setup: transpose, zero-pad to tile multiples and cast L so the
    per-call path never re-pads / re-casts the O(nv^2) buffer."""
    laplacian = jnp.asarray(laplacian)
    nv = laplacian.shape[0]
    assert laplacian.shape == (nv, nv)
    itemsize = np.dtype(dtype).itemsize
    tm, tk, m_pad, k_pad, budget = _choose_tiles(nv, itemsize, tm, tk)
    lt = jnp.swapaxes(laplacian, 0, 1)                 # L^T[k, m] = L[m, k]
    if (k_pad, m_pad) != (nv, nv):
        lt = jnp.pad(lt, ((0, k_pad - nv), (0, m_pad - nv)))
    lt = lt.astype(dtype)
    return PreparedLaplacian(lt=lt, nv=nv, tm=tm, tk=tk, vmem_limit=budget)


def laplacian_loss(prep: PreparedLaplacian, x, *, size_factor=1.0,
                   average=False):
    nv, tm, tk = prep.nv, prep.tm, prep.tk
    k_pad, m_pad = prep.lt.shape
    num_m, num_k = m_pad // tm, k_pad // tk
    assert x.shape[0] == nv
    ncoord = x.shape[1]

    # x is tiny: transpose, cast to L's storage dtype once, pad per call.
    xt = jnp.swapaxes(x, 0, 1).astype(prep.lt.dtype)   # (3, nv)
    if k_pad != nv:
        xt = jnp.pad(xt, ((0, 0), (0, k_pad - nv)))    # zero cols contribute 0

    partials = pl.pallas_call(
        _laplacian_loss_kernel,
        out_shape=jax.ShapeDtypeStruct((num_m, 8, 128), jnp.float32),
        grid_spec=pltpu.PrefetchScalarGridSpec(
            num_scalar_prefetch=0,
            grid=(num_m, num_k),               # K innermost: accumulator axis
            in_specs=[
                pl.BlockSpec((ncoord, tk), lambda i, k: (0, k)),  # x^T (tiny)
                pl.BlockSpec((tk, tm), lambda i, k: (k, i)),      # L^T stream
            ],
            out_specs=pl.BlockSpec((1, 8, 128), lambda i, k: (i, 0, 0)),
            scratch_shapes=[pltpu.VMEM((ncoord, tm), jnp.float32)],
        ),
        compiler_params=pltpu.CompilerParams(
            dimension_semantics=("parallel", "arbitrary"),
            vmem_limit_bytes=prep.vmem_limit),
    )(xt, prep.lt)

    # size_factor hoisted out of the kernel: L @ (s*x) == s * (L @ x), so the
    # squared sum scales by s**2.  Keeps the pallas_call trace-stable.
    total = jnp.sum(partials[:, 0, 0]) * jnp.float32(size_factor) ** 2
    per_batch = total.reshape((1,))            # batch dim of 1 (x.unsqueeze(0))
    if average:
        return jnp.sum(per_batch) / jnp.float32(1.0)   # batch_size == 1
    return per_batch


class LaplacianLoss:
    """Pallas-TPU port of the PyTorch module (forward semantics preserved)."""

    def __init__(self, vertex, faces, average=False, size_factor=1.0,
                 *, lap_dtype=jnp.bfloat16, tm=None, tk=None):
        faces = np.asarray(faces)
        self.nv = int(np.asarray(vertex).shape[0])
        self.nf = int(faces.shape[0])
        self.average = average
        self.size_factor = size_factor
        lap = _build_laplacian(self.nv, faces)
        self._prep = prepare_laplacian(lap, dtype=lap_dtype, tm=tm, tk=tk)

    def __call__(self, x):
        return laplacian_loss(self._prep, x, size_factor=self.size_factor,
                              average=self.average)


# ----------------------------------------------------------------------------
# Demo / self-test.
# ----------------------------------------------------------------------------
if __name__ == "__main__":
    def make_strip_faces(nv, nf):
        return np.stack([np.arange(nf) % nv,
                         (np.arange(nf) + 1) % nv,
                         (np.arange(nf) + 2) % nv], axis=1).astype(np.int64)

    key = jax.random.PRNGKey(0)

    # --- test 1: tiny mesh, exact f32-L path, non-trivial size_factor -------
    nv, nf, sf = 64, 96, 1.5
    faces = make_strip_faces(nv, nf)
    lap = jnp.asarray(_build_laplacian(nv, faces))
    key, sub = jax.random.split(key)
    verts = jax.random.normal(sub, (nv, 3), dtype=jnp.float32)

    mod = LaplacianLoss(verts, faces, average=False, size_factor=sf,
                        lap_dtype=jnp.float32)
    loss = jax.block_until_ready(mod(verts))
    ref = jnp.sum((lap @ (verts * sf)) ** 2).reshape((1,))
    assert loss.shape == (1,)
    assert jnp.allclose(loss, ref, rtol=5e-4, atol=1e-3), (loss, ref)

    # --- test 2: nv=300, forced small tiles -> multi (row, K) grid + padding -
    nv2, nf2 = 300, 450
    faces2 = make_strip_faces(nv2, nf2)
    lap2 = jnp.asarray(_build_laplacian(nv2, faces2))
    key, sub = jax.random.split(key)
    x2 = jax.random.normal(sub, (nv2, 3), dtype=jnp.float32)
    ref2 = jnp.sum((lap2 @ x2) ** 2).reshape((1,))

    prep_small = prepare_laplacian(lap2, dtype=jnp.float32, tm=128, tk=128)
    loss2 = jax.block_until_ready(laplacian_loss(prep_small, x2))
    assert jnp.allclose(loss2, ref2, rtol=5e-4, atol=1e-3), (loss2, ref2)

    # --- test 2b: auto tile plan (>= 2 row tiles so megacore can engage) -----
    prep_auto = prepare_laplacian(lap2, dtype=jnp.float32)
    assert prep_auto.lt.shape[1] // prep_auto.tm >= 2
    loss2b = jax.block_until_ready(laplacian_loss(prep_auto, x2))
    assert jnp.allclose(loss2b, ref2, rtol=5e-4, atol=1e-3), (loss2b, ref2)

    # --- test 3: default bf16-L module path (halved HBM traffic) -------------
    mod3 = LaplacianLoss(x2, faces2, average=True)          # bf16 L by default
    loss3 = jax.block_until_ready(mod3(x2))
    assert jnp.allclose(loss3, jnp.sum(ref2), rtol=5e-2, atol=1e-1), (loss3, ref2)

    print("KERNEL_OK")
</pallas_src>

<mosaic_0001>
module attributes {stable_mosaic.version = 11 : i64} {
  func.func @_laplacian_loss_kernel(%arg0: i32, %arg1: i32, %arg2: memref<3x128xf32, #tpu.memory_space<vmem>>, %arg3: memref<128x128xf32, #tpu.memory_space<vmem>>, %arg4: memref<1x8x128xf32, #tpu.memory_space<vmem>>, %arg5: memref<3x128xf32, #tpu.memory_space<vmem>>) attributes {dimension_semantics = [#tpu.dimension_semantics<parallel>, #tpu.dimension_semantics<arbitrary>], iteration_bounds = array<i64: 1, 1>, scalar_prefetch = 0 : i64, scratch_operands = 1 : i64, tpu.core_type = #tpu.core_type<tc>, window_params = [{transform_indices = @transform_0, window_bounds = array<i64: 3, 128>}, {transform_indices = @transform_1, window_bounds = array<i64: 128, 128>}, {transform_indices = @transform_2, window_bounds = array<i64: 1, 8, 128>}]} {
    %c0_i32 = arith.constant 0 : i32
    %0 = arith.cmpi eq, %arg1, %c0_i32 : i32
    %1 = arith.extui %0 : i1 to i32
    %c0_i32_0 = arith.constant 0 : i32
    %2 = arith.cmpi ne, %1, %c0_i32_0 : i32
    scf.if %2 {
      %cst_10 = arith.constant 0.000000e+00 : f32
      %12 = vector.broadcast %cst_10 : f32 to vector<3x128xf32>
      %c0_11 = arith.constant 0 : index
      %c0_12 = arith.constant 0 : index
      %13 = vector.load %arg5[%c0_11, %c0_12] : memref<3x128xf32, #tpu.memory_space<vmem>>, vector<3x128xf32>
      tpu.vector_store %arg5[%c0_11, %c0_12], %12 {strides = array<i32>} : memref<3x128xf32, #tpu.memory_space<vmem>>, vector<3x128xf32>,
    } else {
    }
    %c0 = arith.constant 0 : index
    %c0_1 = arith.constant 0 : index
    %3 = vector.load %arg5[%c0, %c0_1] : memref<3x128xf32, #tpu.memory_space<vmem>>, vector<3x128xf32>
    %c0_2 = arith.constant 0 : index
    %c0_3 = arith.constant 0 : index
    %4 = vector.load %arg2[%c0_2, %c0_3] : memref<3x128xf32, #tpu.memory_space<vmem>>, vector<3x128xf32>
    %c0_4 = arith.constant 0 : index
    %c0_5 = arith.constant 0 : index
    %5 = vector.load %arg3[%c0_4, %c0_5] : memref<128x128xf32, #tpu.memory_space<vmem>>, vector<128x128xf32>
    %cst = arith.constant dense<0.000000e+00> : vector<3x128xf32>
    %6 = tpu.matmul %4, %5, %cst {dimension_numbers = #tpu.dot_dimension_numbers<[1], [0], [0], [1], [0, 0, 1, 1], [], []>} : vector<3x128xf32>, vector<128x128xf32>, vector<3x128xf32> -> vector<3x128xf32>
    %7 = arith.addf %3, %6 : vector<3x128xf32>
    %c0_6 = arith.constant 0 : index
    %c0_7 = arith.constant 0 : index
    %8 = vector.load %arg5[%c0_6, %c0_7] : memref<3x128xf32, #tpu.memory_space<vmem>>, vector<3x128xf32>
    tpu.vector_store %arg5[%c0_6, %c0_7], %7 {strides = array<i32>} : memref<3x128xf32, #tpu.memory_space<vmem>>, vector<3x128xf32>,
    %c0_i32_8 = arith.constant 0 : i32
    %9 = arith.cmpi eq, %arg1, %c0_i32_8 : i32
    %10 = arith.extui %9 : i1 to i32
    %c0_i32_9 = arith.constant 0 : i32
    %11 = arith.cmpi ne, %10, %c0_i32_9 : i32
    scf.if %11 {
      %c0_10 = arith.constant 0 : index
      %c0_11 = arith.constant 0 : index
      %12 = vector.load %arg5[%c0_10, %c0_11] : memref<3x128xf32, #tpu.memory_space<vmem>>, vector<3x128xf32>
      %13 = arith.mulf %12, %12 : vector<3x128xf32>
      %14 = vector.shape_cast %13 : vector<3x128xf32> to vector<1x3x128xf32>
      %cst_12 = arith.constant dense<0.000000e+00> : vector<1xf32>
      %15 = vector.multi_reduction <add>, %14, %cst_12 [1, 2] : vector<1x3x128xf32> to vector<1xf32>
      %16 = vector.shape_cast %15 : vector<1xf32> to vector<1x1x1xf32>
      %17 = vector.extract %16[0, 0, 0] : f32 from vector<1x1x1xf32>
      %18 = vector.broadcast %17 : f32 to vector<1x8x128xf32>
      %c0_13 = arith.constant 0 : index
      %c0_14 = arith.constant 0 : index
      %c0_15 = arith.constant 0 : index
      %19 = vector.load %arg4[%c0_13, %c0_14, %c0_15] : memref<1x8x128xf32, #tpu.memory_space<vmem>>, vector<1x8x128xf32>
      tpu.vector_store %arg4[%c0_13, %c0_14, %c0_15], %18 {strides = array<i32>} : memref<1x8x128xf32, #tpu.memory_space<vmem>>, vector<1x8x128xf32>,
    } else {
    }
    return
  }
  func.func @transform_0(%arg0: i32, %arg1: i32) -> (i32, i32) {
    %c0_i32 = arith.constant 0 : i32
    %c0_i32_0 = arith.constant 0 : i32
    return %c0_i32, %arg1 : i32, i32
  }
  func.func @transform_1(%arg0: i32, %arg1: i32) -> (i32, i32) {
    %c0_i32 = arith.constant 0 : i32
    return %arg1, %arg0 : i32, i32
  }
  func.func @transform_2(%arg0: i32, %arg1: i32) -> (i32, i32, i32) {
    %c0_i32 = arith.constant 0 : i32
    %c0_i32_0 = arith.constant 0 : i32
    %c0_i32_1 = arith.constant 0 : i32
    return %arg0, %c0_i32, %c0_i32_0 : i32, i32, i32
  }
}

</mosaic_0001>

<llo_original>
// kernel: tpu_custom_call.1
$region0: #{tpu_custom_call.1}
  #allocation0 [shape = 'u32[]', space=smem, size = 0x4, offset = 0x4, fixed_abs, tag = 'smem constant byte address 0x4 - core index']
  #allocation1 [shape = 'u32[144,128]{1,0:T(1,128)}', space=vmem, size = 0x12000, scoped, tag = 'internal scratch']
  #allocation2 [shape = 'f32[3,128]{1,0:T(4,128)}', space=vmem, size = 0x800, scoped, tag = 'scratch operand']
  %s0 = inlined_call_operand.hbm [shape: f32[3,128], index: 0, kind: input, shape index: {}]
  %s1 = inlined_call_operand.hbm [shape: f32[128,128], index: 1, kind: input, shape index: {}]
  %s2 = inlined_call_operand.hbm [shape: f32[1,8,128], index: 2, kind: output, shape index: {}]
  %s3 = sld [smem:[#allocation0]]
  $region34: #{tpu_custom_call.1} parent=0
    _
  %s5 = ssub.s32 1, %s3
  %s6 = scalar_select 0, %s5, %s3
  $region1: #{tpu_custom_call.1} parent=0
    #allocation3 [shape = 'u8[2048]{0}', space=vmem, size = 0x800, scoped, tag = 'input window, operand 0, single buffered']
    #allocation4 [shape = 's32[1]{0}', space=sflag, size = 0x4, scoped, tag = 'scoped memory for tpu_custom_call.1']
    #allocation5 [shape = 's32[1]{0}', space=sflag, size = 0x4, scoped, tag = 'scoped memory for tpu_custom_call.1']
    #allocation6 [shape = 'u8[65536]{0}', space=vmem, size = 0x10000, scoped, tag = 'input window, operand 1, single buffered']
    #allocation7 [shape = 's32[1]{0}', space=sflag, size = 0x4, scoped, tag = 'scoped memory for tpu_custom_call.1']
    #allocation8 [shape = 'u8[4096]{0}', space=vmem, size = 0x1000, scoped, tag = 'output window, operand 0, single buffered']
    %7 = vsyncpa [#allocation4], 0
    %8 = vsyncpa [#allocation7], 0
    %9 = vsyncpa [#allocation5], 0
    // Predicated region
    $region2: #{tpu_custom_call.1} parent=1 // pred_check
      _
    $region3: #{tpu_custom_call.1} parent=1 // pred_check_branch
      %11 = sbr.rel (0) target = $region5
    $region4: #{tpu_custom_call.1} parent=1 // pred_region
      %s13 = ssub.s32 64, 64
      %14 = vsyncadd [#allocation4], %s13
      %s16 = sshll.u32 [#allocation3], 4
      %s17 = int_to_ptr.vmem [resolvable:$true] %s16
      %19 = dma.hbm_to_vmem [thread:$0]  %s0, 64, %s17, [#allocation4]
    $region5: #{tpu_custom_call.1} parent=1 // pred_fallthru
      _
    // Predicated region
    $region6: #{tpu_custom_call.1} parent=1 // pred_check
      _
    $region7: #{tpu_custom_call.1} parent=1 // pred_check_branch
      %21 = sbr.rel (0) target = $region9
    $region8: #{tpu_custom_call.1} parent=1 // pred_region
      %s23 = ssub.s32 2048, 2048
      %24 = vsyncadd [#allocation7], %s23
      %s25 = sshll.u32 [#allocation6], 4
      %s26 = int_to_ptr.vmem [resolvable:$true] %s25
      %31 = dma.hbm_to_vmem [thread:$0]  %s1, 2048, %s26, [#allocation7], 128, 128, 8
    $region9: #{tpu_custom_call.1} parent=1 // pred_fallthru
      _
    // Predicated region
    $region10: #{tpu_custom_call.1} parent=1 // pred_check
      _
    $region11: #{tpu_custom_call.1} parent=1 // pred_check_branch
      %33 = sbr.rel (0) target = $region13
    $region12: #{tpu_custom_call.1} parent=1 // pred_region
      %34 = dma.done [#allocation4], 64
    $region13: #{tpu_custom_call.1} parent=1 // pred_fallthru
      _
    // Predicated region
    $region14: #{tpu_custom_call.1} parent=1 // pred_check
      _
    $region15: #{tpu_custom_call.1} parent=1 // pred_check_branch
      %36 = sbr.rel (0) target = $region17
    $region16: #{tpu_custom_call.1} parent=1 // pred_region
      %37 = dma.done [#allocation7], 2048
    $region17: #{tpu_custom_call.1} parent=1 // pred_fallthru
      _
    %p38 = scmp.eq.s32.totalorder 0, 0
    // Predicated region
    $region18: #{tpu_custom_call.1} parent=1 // pred_check
      %p39 = pneg %p38
    $region19: #{tpu_custom_call.1} parent=1 // pred_check_branch
      %41 = sbr.rel (%p39) target = $region21
    $region20: #{tpu_custom_call.1} parent=1 // pred_region
      %42 = vst [vmem:[#allocation2] sm:$0x7] 0.0
    $region21: #{tpu_custom_call.1} parent=1 // pred_fallthru
      _
    %v43 = vld [vmem:[#allocation2] sm:$0x7]
    %v44 = vld [vmem:[#allocation3] sm:$0x7]
    %v45 = vld [vmem:[#allocation6] sm:$0xff]
    %v46 = vld [vmem:[#allocation6 + $0x8] sm:$0xff]
    %v47 = vld [vmem:[#allocation6 + $0x10] sm:$0xff]
    %v48 = vld [vmem:[#allocation6 + $0x18] sm:$0xff]
    %v49 = vld [vmem:[#allocation6 + $0x20] sm:$0xff]
    %v50 = vld [vmem:[#allocation6 + $0x28] sm:$0xff]
    %v51 = vld [vmem:[#allocation6 + $0x30] sm:$0xff]
    %v52 = vld [vmem:[#allocation6 + $0x38] sm:$0xff]
    %v53 = vld [vmem:[#allocation6 + $0x40] sm:$0xff]
    %v54 = vld [vmem:[#allocation6 + $0x48] sm:$0xff]
    %v55 = vld [vmem:[#allocation6 + $0x50] sm:$0xff]
    %v56 = vld [vmem:[#allocation6 + $0x58] sm:$0xff]
    %v57 = vld [vmem:[#allocation6 + $0x60] sm:$0xff]
    %v58 = vld [vmem:[#allocation6 + $0x68] sm:$0xff]
    %v59 = vld [vmem:[#allocation6 + $0x70] sm:$0xff]
    %v60 = vld [vmem:[#allocation6 + $0x78] sm:$0xff]
    %61 = vmatprep.subr.mxu0 0.0
    %62 = vmatpush1.msra.mxu0 %v45
    %63 = vmatprep.subr.mxu0 0.0
    %64 = vmatpush1.msra.mxu0 %v46
    %65 = vmatprep.subr.mxu0 0.0
    %66 = vmatpush1.msra.mxu0 %v47
    %67 = vmatprep.subr.mxu0 0.0
    %68 = vmatpush1.msra.mxu0 %v48
    %69 = vmatprep.subr.mxu0 0.0
    %70 = vmatpush1.msra.mxu0 %v49
    %71 = vmatprep.subr.mxu0 0.0
    %72 = vmatpush1.msra.mxu0 %v50
    %73 = vmatprep.subr.mxu0 0.0
    %74 = vmatpush1.msra.mxu0 %v51
    %75 = vmatprep.subr.mxu0 0.0
    %76 = vmatpush1.msra.mxu0 %v52
    %77 = vmatprep.subr.mxu0 0.0
    %78 = vmatpush1.msra.mxu0 %v53
    %79 = vmatprep.subr.mxu0 0.0
    %80 = vmatpush1.msra.mxu0 %v54
    %81 = vmatprep.subr.mxu0 0.0
    %82 = vmatpush1.msra.mxu0 %v55
    %83 = vmatprep.subr.mxu0 0.0
    %84 = vmatpush1.msra.mxu0 %v56
    %85 = vmatprep.subr.mxu0 0.0
    %86 = vmatpush1.msra.mxu0 %v57
    %87 = vmatprep.subr.mxu0 0.0
    %88 = vmatpush1.msra.mxu0 %v58
    %89 = vmatprep.subr.mxu0 0.0
    %90 = vmatpush1.msra.mxu0 %v59
    %91 = vmatprep.subr.mxu0 0.0
    %92 = vmatpush1.msra.mxu0 %v60
    %93 = vmatprep.subr.mxu0 0.0
    %94 = vmatpush1.msra.mxu0 0.0
    %95 = vmatprep.subr.mxu0 0.0
    %96 = vmatpush1.msra.mxu0 0.0
    %97 = vmatprep.subr.mxu0 0.0
    %98 = vmatpush1.msra.mxu0 0.0
    %99 = vmatprep.subr.mxu0 0.0
    %100 = vmatpush1.msra.mxu0 0.0
    %101 = vmatprep.subr.mxu0 0.0
    %102 = vmatpush1.msra.mxu0 0.0
    %103 = vmatprep.subr.mxu0 0.0
    %104 = vmatpush1.msra.mxu0 0.0
    %105 = vmatprep.subr.mxu0 0.0
    %106 = vmatpush1.msra.mxu0 0.0
    %107 = vmatprep.subr.mxu0 0.0
    %108 = vmatpush1.msra.mxu0 0.0
    %109 = vmatprep.subr.mxu0 0.0
    %110 = vmatpush1.msra.mxu0 0.0
    %111 = vmatprep.subr.mxu0 0.0
    %112 = vmatpush1.msra.mxu0 0.0
    %113 = vmatprep.subr.mxu0 0.0
    %114 = vmatpush1.msra.mxu0 0.0
    %115 = vmatprep.subr.mxu0 0.0
    %116 = vmatpush1.msra.mxu0 0.0
    %117 = vmatprep.subr.mxu0 0.0
    %118 = vmatpush1.msra.mxu0 0.0
    %119 = vmatprep.subr.mxu0 0.0
    %120 = vmatpush1.msra.mxu0 0.0
    %121 = vmatprep.subr.mxu0 0.0
    %122 = vmatpush1.msra.mxu0 0.0
    %123 = vmatprep.subr.mxu0 0.0
    %124 = vmatpush1.msra.mxu0 0.0
    %125 = vmatprep.mubr.f32.mxu0 0.0
    %126 = vmatmul.mubr.f32.gmra.mrb[0].mxu0 %v44
    %v127 = vpop.f32.mrb[0].mxu0
    %v128 = vadd.f32 0.0, %v127
    %v129 = vpop.f32.mrb[0].mxu0
    %130 = vdwg.mxu0
    %v131 = vadd.f32 %v43, %v128
    %132 = vst [vmem:[#allocation2] sm:$0x7] %v131
    // Predicated region
    $region22: #{tpu_custom_call.1} parent=1 // pred_check
      %p133 = pneg %p38
    $region23: #{tpu_custom_call.1} parent=1 // pred_check_branch
      %135 = sbr.rel (%p133) target = $region25
    $region24: #{tpu_custom_call.1} parent=1 // pred_region
      %v136 = vld [vmem:[#allocation2] sm:$0x7]
      %v137 = vmul.f32 %v136, %v136
      %vm138 = vcmask 1042432
      %v139 = vsel %vm138, %v137, 0.0
      %140 = vadd.xlane.f32.xlu0 %v139
      %v141 = vpop.xlane.xlu0 %140
      %v142 = vrot.slane %v141, 4
      %v143 = vadd.f32 %v141, %v142
      %v144 = vrot.slane %v143, 2
      %v145 = vadd.f32 %v143, %v144
      %v146 = vrot.slane %v145, 1
      %v147 = vadd.f32 %v145, %v146
      %s148 = vtos %v147
      %v149 = vstv %s148
      %150 = vst [vmem:[#allocation8] sm:$0xff] %v149
    $region25: #{tpu_custom_call.1} parent=1 // pred_fallthru
      _
    // Predicated region
    $region26: #{tpu_custom_call.1} parent=1 // pred_check
      _
    $region27: #{tpu_custom_call.1} parent=1 // pred_check_branch
      %152 = sbr.rel (0) target = $region29
    $region28: #{tpu_custom_call.1} parent=1 // pred_region
      %s154 = ssub.s32 128, 128
      %155 = vsyncadd [#allocation5], %s154
      %s157 = sshll.u32 [#allocation8], 4
      %s158 = int_to_ptr.vmem [resolvable:$true] %s157
      %160 = dma.vmem_to_hbm [thread:$0]  %s158, 128, %s2, [#allocation5]
    $region29: #{tpu_custom_call.1} parent=1 // pred_fallthru
      _
    // Predicated region
    $region30: #{tpu_custom_call.1} parent=1 // pred_check
      _
    $region31: #{tpu_custom_call.1} parent=1 // pred_check_branch
      %162 = sbr.rel (0) target = $region33
    $region32: #{tpu_custom_call.1} parent=1 // pred_region
      %163 = dma.done [#allocation5], 128
    $region33: #{tpu_custom_call.1} parent=1 // pred_fallthru
      _
    %164 = vsyncpa [#allocation4], 1
    %165 = vsyncpa [#allocation7], 1
    %166 = vsyncpa [#allocation5], 1

</llo_original>
